<compile_context>
chip_gen: v6e
topology: v6e:2x2x1
jax: 0.10.0
libtpu: 0.0.40
codegen_flags: <defaults>
</compile_context>

<pallas_src>
import jax
import jax.numpy as jnp
from jax.experimental import pallas as pl
from jax.experimental.pallas import tpu as pltpu

STATE_SIZE = 7
ACTION_SIZE = 6
HIDDEN = 64
N_LAYERS = 7
IN_PAD = 8            # input features padded to one sublane-aligned 8-lane slab
OUT_PAD = 8           # output Q-values padded to 8 lanes (cols [0:6] valid)


def _round_up(x, m):
    return (x + m - 1) // m * m


def _cdiv(a, b):
    return (a + b - 1) // b


def qnetwork_kernel(w_ref, b_ref, x_ref, out_ref):
    """Fully fused 7-layer MLP on one (TB, 8) activation tile.

    w_ref  : (7, 64, 64) stacked, zero-padded weights (f32 or bf16), VMEM-resident
    b_ref  : (7, 1, 64)  stacked, zero-padded biases (f32), VMEM-resident
    x_ref  : (TB, 8)     zero-padded input activations (f32)
    out_ref: (TB, 8)     lane-stripped output; columns [0:6] hold the Q-values
    """
    wdt = w_ref.dtype

    # Layer 0: contract over K=8 against the top 8 rows of the padded weight.
    x = x_ref[...]
    z = jnp.dot(x.astype(wdt), w_ref[0][:IN_PAD, :],
                preferred_element_type=jnp.float32) + b_ref[0]
    h = jnp.maximum(z, 0.0)

    # Hidden layers 1..5: (TB, 64) x (64, 64), f32 accumulate, f32 bias/ReLU.
    # Static Python loop -> fully unrolled at trace time.
    for i in range(1, N_LAYERS - 1):
        z = jnp.dot(h.astype(wdt), w_ref[i],
                    preferred_element_type=jnp.float32) + b_ref[i]
        h = jnp.maximum(z, 0.0)

    # Output layer (no ReLU); only the first 8 lanes are written back.
    out = jnp.dot(h.astype(wdt), w_ref[N_LAYERS - 1],
                  preferred_element_type=jnp.float32) + b_ref[N_LAYERS - 1]
    out_ref[...] = out[:, :OUT_PAD].astype(out_ref.dtype)


def qnetwork_forward(x, w_stack, b_stack, *, block_b=1024):
    """x: (B, STATE_SIZE) float32. Returns (B, ACTION_SIZE) float32 Q-values."""
    B, f_in = x.shape
    assert f_in == STATE_SIZE

    b_min = _round_up(B, 8)
    if b_min >= 16:
        # >= 2 grid steps so v7x can shard the batch axis over both
        # TensorCores; capped by block_b so per-step VMEM stays small.
        tb = min(block_b, _round_up(_cdiv(b_min, 2), 8))
    else:
        tb = b_min
    n_tiles = _cdiv(b_min, tb)
    b_pad = n_tiles * tb                      # padding waste <= tb - 8 rows

    # Only 8 lanes of input are materialized / DMA'd (cols [0:7] = state).
    x_pad = jnp.zeros((b_pad, IN_PAD), jnp.float32).at[:B, :f_in].set(x)

    flops = 2 * b_pad * (IN_PAD * HIDDEN + (N_LAYERS - 1) * HIDDEN * HIDDEN)
    bytes_accessed = (b_pad * IN_PAD * 4 + b_pad * OUT_PAD * 4
                      + int(w_stack.size) * w_stack.dtype.itemsize
                      + int(b_stack.size) * 4)

    out = pl.pallas_call(
        qnetwork_kernel,
        out_shape=jax.ShapeDtypeStruct((b_pad, OUT_PAD), jnp.float32),
        grid=(n_tiles,),
        in_specs=[
            # Weights / biases: constant block index -> stay VMEM-resident.
            pl.BlockSpec(w_stack.shape, lambda i: (0, 0, 0)),
            pl.BlockSpec(b_stack.shape, lambda i: (0, 0, 0)),
            # Activations: tiled over the batch grid axis, 8 lanes only.
            pl.BlockSpec((tb, IN_PAD), lambda i: (i, 0)),
        ],
        out_specs=pl.BlockSpec((tb, OUT_PAD), lambda i: (i, 0)),
        compiler_params=pltpu.CompilerParams(
            dimension_semantics=("parallel",)),
        cost_estimate=pl.CostEstimate(
            flops=flops, transcendentals=0, bytes_accessed=bytes_accessed),
    )(w_stack, b_stack, x_pad)
    return out[:B, :ACTION_SIZE]


def init_params(key):
    """PyTorch nn.Linear default init (uniform +/- 1/sqrt(fan_in)), actual sizes."""
    sizes = [(STATE_SIZE, HIDDEN)] + [(HIDDEN, HIDDEN)] * 5 + [(HIDDEN, ACTION_SIZE)]
    params = []
    for fan_in, fan_out in sizes:
        key, kw, kb = jax.random.split(key, 3)
        bound = 1.0 / jnp.sqrt(jnp.float32(fan_in))
        w = jax.random.uniform(kw, (fan_in, fan_out), jnp.float32, -bound, bound)
        b = jax.random.uniform(kb, (fan_out,), jnp.float32, -bound, bound)
        params.append((w, b))
    return params


def pack_params(params, weight_dtype=jnp.bfloat16):
    """Stack + zero-pad the 7 layers into two arrays (15 DMAs -> 2).

    Max fan_in / fan_out is 64, so a (7, 64, 64) pack suffices (no 128-lane
    K/N padding).  Biases stay f32 regardless of weight_dtype.
    """
    w_stack = jnp.zeros((N_LAYERS, HIDDEN, HIDDEN), jnp.float32)
    b_stack = jnp.zeros((N_LAYERS, 1, HIDDEN), jnp.float32)
    for i, (w, b) in enumerate(params):
        fi, fo = w.shape
        w_stack = w_stack.at[i, :fi, :fo].set(w)
        b_stack = b_stack.at[i, 0, :fo].set(b)
    return w_stack.astype(weight_dtype), b_stack


def reference_forward(x, params):
    h = x
    for i, (w, b) in enumerate(params):
        h = h @ w + b
        if i < len(params) - 1:
            h = jnp.maximum(h, 0.0)
    return h


if __name__ == "__main__":
    key = jax.random.PRNGKey(0)
    key, kx = jax.random.split(key)
    batch = 32
    x = jax.random.normal(kx, (batch, STATE_SIZE), jnp.float32)
    params = init_params(key)
    ref = reference_forward(x, params)

    # f32 weights: tight check against the pure-JAX reference.
    w_f32, b_f32 = pack_params(params, jnp.float32)
    out_f32 = jax.block_until_ready(qnetwork_forward(x, w_f32, b_f32))
    assert out_f32.shape == (batch, ACTION_SIZE)
    assert jnp.allclose(out_f32, ref, atol=1e-4, rtol=1e-4), "f32 mismatch vs reference"

    # Default path: bf16 weight storage (MXU-native), f32 accumulation.
    # Loose value check + greedy-action agreement against the f32 path.
    w_bf16, b_bf16 = pack_params(params)
    out_bf16 = jax.block_until_ready(qnetwork_forward(x, w_bf16, b_bf16))
    assert out_bf16.shape == (batch, ACTION_SIZE)
    assert jnp.allclose(out_bf16, ref, atol=1e-1, rtol=1e-1), "bf16 mismatch vs reference"
    agree = jnp.mean(
        (jnp.argmax(out_bf16, axis=-1) == jnp.argmax(out_f32, axis=-1)).astype(jnp.float32))
    assert agree >= 0.75, f"bf16 greedy-action agreement too low: {agree}"

    print("KERNEL_OK")
</pallas_src>

<mosaic_0001>
module attributes {stable_mosaic.version = 11 : i64} {
  func.func @qnetwork_kernel(%arg0: i32, %arg1: memref<7x64x64xf32, #tpu.memory_space<vmem>>, %arg2: memref<7x1x64xf32, #tpu.memory_space<vmem>>, %arg3: memref<16x8xf32, #tpu.memory_space<vmem>>, %arg4: memref<16x8xf32, #tpu.memory_space<vmem>>) attributes {dimension_semantics = [#tpu.dimension_semantics<parallel>], iteration_bounds = array<i64: 2>, scalar_prefetch = 0 : i64, scratch_operands = 0 : i64, tpu.core_type = #tpu.core_type<tc>, window_params = [{pipeline_mode = #tpu.pipeline_mode<synchronous>, transform_indices = @transform_0, window_bounds = array<i64: 7, 64, 64>}, {pipeline_mode = #tpu.pipeline_mode<synchronous>, transform_indices = @transform_1, window_bounds = array<i64: 7, 1, 64>}, {transform_indices = @transform_2, window_bounds = array<i64: 16, 8>}, {transform_indices = @transform_3, window_bounds = array<i64: 16, 8>}]} {
    %c0 = arith.constant 0 : index
    %c0_0 = arith.constant 0 : index
    %0 = vector.load %arg3[%c0, %c0_0] : memref<16x8xf32, #tpu.memory_space<vmem>>, vector<16x8xf32>
    %c0_1 = arith.constant 0 : index
    %c0_2 = arith.constant 0 : index
    %c0_3 = arith.constant 0 : index
    %1 = vector.load %arg1[%c0_1, %c0_2, %c0_3] : memref<7x64x64xf32, #tpu.memory_space<vmem>>, vector<1x64x64xf32>
    %2 = vector.shape_cast %1 : vector<1x64x64xf32> to vector<64x64xf32>
    %3 = vector.extract_strided_slice %2 {offsets = [0, 0], sizes = [8, 64], strides = [1, 1]} : vector<64x64xf32> to vector<8x64xf32>
    %cst = arith.constant dense<0.000000e+00> : vector<16x64xf32>
    %4 = tpu.matmul %0, %3, %cst {dimension_numbers = #tpu.dot_dimension_numbers<[1], [0], [0], [1], [0, 0, 1, 1], [], []>} : vector<16x8xf32>, vector<8x64xf32>, vector<16x64xf32> -> vector<16x64xf32>
    %c0_4 = arith.constant 0 : index
    %c0_5 = arith.constant 0 : index
    %c0_6 = arith.constant 0 : index
    %5 = vector.load %arg2[%c0_4, %c0_5, %c0_6] : memref<7x1x64xf32, #tpu.memory_space<vmem>>, vector<1x1x64xf32>
    %6 = vector.shape_cast %5 : vector<1x1x64xf32> to vector<1x64xf32>
    %7 = vector.broadcast %6 : vector<1x64xf32> to vector<16x64xf32>
    %8 = arith.addf %4, %7 : vector<16x64xf32>
    %cst_7 = arith.constant 0.000000e+00 : f32
    %9 = vector.broadcast %cst_7 : f32 to vector<16x64xf32>
    %10 = arith.maximumf %8, %9 : vector<16x64xf32>
    %c1 = arith.constant 1 : index
    %c0_8 = arith.constant 0 : index
    %c0_9 = arith.constant 0 : index
    %11 = vector.load %arg1[%c1, %c0_8, %c0_9] : memref<7x64x64xf32, #tpu.memory_space<vmem>>, vector<1x64x64xf32>
    %12 = vector.shape_cast %11 : vector<1x64x64xf32> to vector<64x64xf32>
    %cst_10 = arith.constant dense<0.000000e+00> : vector<16x64xf32>
    %13 = tpu.matmul %10, %12, %cst_10 {dimension_numbers = #tpu.dot_dimension_numbers<[1], [0], [0], [1], [0, 0, 1, 1], [], []>} : vector<16x64xf32>, vector<64x64xf32>, vector<16x64xf32> -> vector<16x64xf32>
    %c1_11 = arith.constant 1 : index
    %c0_12 = arith.constant 0 : index
    %c0_13 = arith.constant 0 : index
    %14 = vector.load %arg2[%c1_11, %c0_12, %c0_13] : memref<7x1x64xf32, #tpu.memory_space<vmem>>, vector<1x1x64xf32>
    %15 = vector.shape_cast %14 : vector<1x1x64xf32> to vector<1x64xf32>
    %16 = vector.broadcast %15 : vector<1x64xf32> to vector<16x64xf32>
    %17 = arith.addf %13, %16 : vector<16x64xf32>
    %cst_14 = arith.constant 0.000000e+00 : f32
    %18 = vector.broadcast %cst_14 : f32 to vector<16x64xf32>
    %19 = arith.maximumf %17, %18 : vector<16x64xf32>
    %c2 = arith.constant 2 : index
    %c0_15 = arith.constant 0 : index
    %c0_16 = arith.constant 0 : index
    %20 = vector.load %arg1[%c2, %c0_15, %c0_16] : memref<7x64x64xf32, #tpu.memory_space<vmem>>, vector<1x64x64xf32>
    %21 = vector.shape_cast %20 : vector<1x64x64xf32> to vector<64x64xf32>
    %cst_17 = arith.constant dense<0.000000e+00> : vector<16x64xf32>
    %22 = tpu.matmul %19, %21, %cst_17 {dimension_numbers = #tpu.dot_dimension_numbers<[1], [0], [0], [1], [0, 0, 1, 1], [], []>} : vector<16x64xf32>, vector<64x64xf32>, vector<16x64xf32> -> vector<16x64xf32>
    %c2_18 = arith.constant 2 : index
    %c0_19 = arith.constant 0 : index
    %c0_20 = arith.constant 0 : index
    %23 = vector.load %arg2[%c2_18, %c0_19, %c0_20] : memref<7x1x64xf32, #tpu.memory_space<vmem>>, vector<1x1x64xf32>
    %24 = vector.shape_cast %23 : vector<1x1x64xf32> to vector<1x64xf32>
    %25 = vector.broadcast %24 : vector<1x64xf32> to vector<16x64xf32>
    %26 = arith.addf %22, %25 : vector<16x64xf32>
    %cst_21 = arith.constant 0.000000e+00 : f32
    %27 = vector.broadcast %cst_21 : f32 to vector<16x64xf32>
    %28 = arith.maximumf %26, %27 : vector<16x64xf32>
    %c3 = arith.constant 3 : index
    %c0_22 = arith.constant 0 : index
    %c0_23 = arith.constant 0 : index
    %29 = vector.load %arg1[%c3, %c0_22, %c0_23] : memref<7x64x64xf32, #tpu.memory_space<vmem>>, vector<1x64x64xf32>
    %30 = vector.shape_cast %29 : vector<1x64x64xf32> to vector<64x64xf32>
    %cst_24 = arith.constant dense<0.000000e+00> : vector<16x64xf32>
    %31 = tpu.matmul %28, %30, %cst_24 {dimension_numbers = #tpu.dot_dimension_numbers<[1], [0], [0], [1], [0, 0, 1, 1], [], []>} : vector<16x64xf32>, vector<64x64xf32>, vector<16x64xf32> -> vector<16x64xf32>
    %c3_25 = arith.constant 3 : index
    %c0_26 = arith.constant 0 : index
    %c0_27 = arith.constant 0 : index
    %32 = vector.load %arg2[%c3_25, %c0_26, %c0_27] : memref<7x1x64xf32, #tpu.memory_space<vmem>>, vector<1x1x64xf32>
    %33 = vector.shape_cast %32 : vector<1x1x64xf32> to vector<1x64xf32>
    %34 = vector.broadcast %33 : vector<1x64xf32> to vector<16x64xf32>
    %35 = arith.addf %31, %34 : vector<16x64xf32>
    %cst_28 = arith.constant 0.000000e+00 : f32
    %36 = vector.broadcast %cst_28 : f32 to vector<16x64xf32>
    %37 = arith.maximumf %35, %36 : vector<16x64xf32>
    %c4 = arith.constant 4 : index
    %c0_29 = arith.constant 0 : index
    %c0_30 = arith.constant 0 : index
    %38 = vector.load %arg1[%c4, %c0_29, %c0_30] : memref<7x64x64xf32, #tpu.memory_space<vmem>>, vector<1x64x64xf32>
    %39 = vector.shape_cast %38 : vector<1x64x64xf32> to vector<64x64xf32>
    %cst_31 = arith.constant dense<0.000000e+00> : vector<16x64xf32>
    %40 = tpu.matmul %37, %39, %cst_31 {dimension_numbers = #tpu.dot_dimension_numbers<[1], [0], [0], [1], [0, 0, 1, 1], [], []>} : vector<16x64xf32>, vector<64x64xf32>, vector<16x64xf32> -> vector<16x64xf32>
    %c4_32 = arith.constant 4 : index
    %c0_33 = arith.constant 0 : index
    %c0_34 = arith.constant 0 : index
    %41 = vector.load %arg2[%c4_32, %c0_33, %c0_34] : memref<7x1x64xf32, #tpu.memory_space<vmem>>, vector<1x1x64xf32>
    %42 = vector.shape_cast %41 : vector<1x1x64xf32> to vector<1x64xf32>
    %43 = vector.broadcast %42 : vector<1x64xf32> to vector<16x64xf32>
    %44 = arith.addf %40, %43 : vector<16x64xf32>
    %cst_35 = arith.constant 0.000000e+00 : f32
    %45 = vector.broadcast %cst_35 : f32 to vector<16x64xf32>
    %46 = arith.maximumf %44, %45 : vector<16x64xf32>
    %c5 = arith.constant 5 : index
    %c0_36 = arith.constant 0 : index
    %c0_37 = arith.constant 0 : index
    %47 = vector.load %arg1[%c5, %c0_36, %c0_37] : memref<7x64x64xf32, #tpu.memory_space<vmem>>, vector<1x64x64xf32>
    %48 = vector.shape_cast %47 : vector<1x64x64xf32> to vector<64x64xf32>
    %cst_38 = arith.constant dense<0.000000e+00> : vector<16x64xf32>
    %49 = tpu.matmul %46, %48, %cst_38 {dimension_numbers = #tpu.dot_dimension_numbers<[1], [0], [0], [1], [0, 0, 1, 1], [], []>} : vector<16x64xf32>, vector<64x64xf32>, vector<16x64xf32> -> vector<16x64xf32>
    %c5_39 = arith.constant 5 : index
    %c0_40 = arith.constant 0 : index
    %c0_41 = arith.constant 0 : index
    %50 = vector.load %arg2[%c5_39, %c0_40, %c0_41] : memref<7x1x64xf32, #tpu.memory_space<vmem>>, vector<1x1x64xf32>
    %51 = vector.shape_cast %50 : vector<1x1x64xf32> to vector<1x64xf32>
    %52 = vector.broadcast %51 : vector<1x64xf32> to vector<16x64xf32>
    %53 = arith.addf %49, %52 : vector<16x64xf32>
    %cst_42 = arith.constant 0.000000e+00 : f32
    %54 = vector.broadcast %cst_42 : f32 to vector<16x64xf32>
    %55 = arith.maximumf %53, %54 : vector<16x64xf32>
    %c6 = arith.constant 6 : index
    %c0_43 = arith.constant 0 : index
    %c0_44 = arith.constant 0 : index
    %56 = vector.load %arg1[%c6, %c0_43, %c0_44] : memref<7x64x64xf32, #tpu.memory_space<vmem>>, vector<1x64x64xf32>
    %57 = vector.shape_cast %56 : vector<1x64x64xf32> to vector<64x64xf32>
    %cst_45 = arith.constant dense<0.000000e+00> : vector<16x64xf32>
    %58 = tpu.matmul %55, %57, %cst_45 {dimension_numbers = #tpu.dot_dimension_numbers<[1], [0], [0], [1], [0, 0, 1, 1], [], []>} : vector<16x64xf32>, vector<64x64xf32>, vector<16x64xf32> -> vector<16x64xf32>
    %c6_46 = arith.constant 6 : index
    %c0_47 = arith.constant 0 : index
    %c0_48 = arith.constant 0 : index
    %59 = vector.load %arg2[%c6_46, %c0_47, %c0_48] : memref<7x1x64xf32, #tpu.memory_space<vmem>>, vector<1x1x64xf32>
    %60 = vector.shape_cast %59 : vector<1x1x64xf32> to vector<1x64xf32>
    %61 = vector.broadcast %60 : vector<1x64xf32> to vector<16x64xf32>
    %62 = arith.addf %58, %61 : vector<16x64xf32>
    %63 = vector.extract_strided_slice %62 {offsets = [0, 0], sizes = [16, 8], strides = [1, 1]} : vector<16x64xf32> to vector<16x8xf32>
    %c0_49 = arith.constant 0 : index
    %c0_50 = arith.constant 0 : index
    %64 = vector.load %arg4[%c0_49, %c0_50] : memref<16x8xf32, #tpu.memory_space<vmem>>, vector<16x8xf32>
    tpu.vector_store %arg4[%c0_49, %c0_50], %63 {strides = array<i32>} : memref<16x8xf32, #tpu.memory_space<vmem>>, vector<16x8xf32>,
    return
  }
  func.func @transform_0(%arg0: i32) -> (i32, i32, i32) {
    %c0_i32 = arith.constant 0 : i32
    %c0_i32_0 = arith.constant 0 : i32
    %c0_i32_1 = arith.constant 0 : i32
    %c0_i32_2 = arith.constant 0 : i32
    return %c0_i32, %c0_i32_0, %c0_i32_1 : i32, i32, i32
  }
  func.func @transform_1(%arg0: i32) -> (i32, i32, i32) {
    %c0_i32 = arith.constant 0 : i32
    %c0_i32_0 = arith.constant 0 : i32
    %c0_i32_1 = arith.constant 0 : i32
    %c0_i32_2 = arith.constant 0 : i32
    return %c0_i32, %c0_i32_0, %c0_i32_1 : i32, i32, i32
  }
  func.func @transform_2(%arg0: i32) -> (i32, i32) {
    %c0_i32 = arith.constant 0 : i32
    %c0_i32_0 = arith.constant 0 : i32
    return %arg0, %c0_i32 : i32, i32
  }
  func.func @transform_3(%arg0: i32) -> (i32, i32) {
    %c0_i32 = arith.constant 0 : i32
    %c0_i32_0 = arith.constant 0 : i32
    return %arg0, %c0_i32 : i32, i32
  }
}

</mosaic_0001>

<llo_original>
// kernel: tpu_custom_call.1
$region0: #{tpu_custom_call.1}
  #allocation0 [shape = 'u32[]', space=smem, size = 0x4, offset = 0x4, fixed_abs, tag = 'smem constant byte address 0x4 - core index']
  #allocation1 [shape = 'u32[144,128]{1,0:T(1,128)}', space=vmem, size = 0x12000, scoped, tag = 'internal scratch']
  %s0 = inlined_call_operand.hbm [shape: f32[7,64,64], index: 0, kind: input, shape index: {}]
  %s1 = inlined_call_operand.vmem [shape: f32[7,1,64], index: 1, kind: input, shape index: {}]
  %s2 = inlined_call_operand.vmem [shape: f32[32,8], index: 2, kind: input, shape index: {}]
  %s3 = inlined_call_operand.vmem [shape: f32[32,8], index: 3, kind: output, shape index: {}]
  %s4 = sld [smem:[#allocation0]]
  $region49: #{tpu_custom_call.1} parent=0
    _
  %s6 = ssub.s32 1, %s4
  %s7 = scalar_select 0, %s6, %s4
  $region1: #{tpu_custom_call.1} parent=0
    #allocation2 [shape = 'u8[229376]{0}', space=vmem, size = 0x38000, scoped, tag = 'input window, operand 0, single buffered']
    #allocation3 [shape = 's32[2]{0}', space=sflag, size = 0x8, scoped, tag = 'scoped memory for tpu_custom_call.1']
    %8 = vsyncpa [#allocation3], 0
    loop: start=0, step=1, limit=4
    $region2: #{tpu_custom_call.1} parent=1 // loop_pre_header
      _
    $region3: #{tpu_custom_call.1} parent=1 // loop_header
      %s10 = sphi 0, %s14
      %p11 = scmp.ge.s32.totalorder %s10, 4
      %s18 = sphi 0, %s18
      %s20 = sphi 0, %s18
      %s21 = sphi 0, %s20
      %s35 = sphi 0, %s21
      %s39 = sphi 0, %s39
      %s41 = sphi 0, %s39
      %s42 = sphi 0, %s41
      %s56 = sphi 0, %s42
      %s62 = sphi 0, %s64
      %s65 = sphi 0, %s62
      %s66 = sphi 0, %s65
      %s82 = sphi 0, %s66
      %s88 = sphi 0, %s90
      %s91 = sphi 0, %s88
      %s92 = sphi 0, %s91
      %s108 = sphi 0, %s92
    $region4: #{tpu_custom_call.1} parent=1 // loop_header_branch
      %13 = sbr.rel (%p11) target = $region8
    $region5: #{tpu_custom_call.1} parent=1 // loop_body
      %s15 = ssub.s32 %s10, 1
      %s16 = ssub.s32 %s10, 2
      %s17 = sadd.s32 %s10, 1
      %s19 = sadd.s32 %s18, 1
      %p22 = scmp.eq.s32.totalorder %s10, 1
      %p23 = scmp.ne.s32.totalorder %s18, %s20
      %p24 = scmp.eq.s32.totalorder %s10, 0
      %p25 = por %p23, %p24
      %p26 = scmp.ne.s32.totalorder %s18, %s20
      %p27 = scmp.eq.s32.totalorder %s15, 1
      %p28 = por %p26, %p27
      %p29 = scmp.ne.s32.totalorder %s20, %s21
      %p30 = scmp.eq.s32.totalorder %s15, 0
      %p31 = por %p29, %p30
      %p32 = scmp.ne.s32.totalorder %s20, %s21
      %p33 = scmp.eq.s32.totalorder %s16, 1
      %p34 = por %p32, %p33
      %p36 = scmp.ne.s32.totalorder %s21, %s35
      %p37 = scmp.eq.s32.totalorder %s16, 0
      %p38 = por %p36, %p37
      %s40 = sadd.s32 %s39, 1
      %p43 = scmp.eq.s32.totalorder %s10, 1
      %p44 = scmp.ne.s32.totalorder %s39, %s41
      %p45 = scmp.eq.s32.totalorder %s10, 0
      %p46 = por %p44, %p45
      %p47 = scmp.ne.s32.totalorder %s39, %s41
      %p48 = scmp.eq.s32.totalorder %s15, 1
      %p49 = por %p47, %p48
      %p50 = scmp.ne.s32.totalorder %s41, %s42
      %p51 = scmp.eq.s32.totalorder %s15, 0
      %p52 = por %p50, %p51
      %p53 = scmp.ne.s32.totalorder %s41, %s42
      %p54 = scmp.eq.s32.totalorder %s16, 1
      %p55 = por %p53, %p54
      %p57 = scmp.ne.s32.totalorder %s42, %s56
      %p58 = scmp.eq.s32.totalorder %s16, 0
      %p59 = por %p57, %p58
      %s60 = ssub.s32 %s10, %s17
      %p61 = scmp.eq.s32.totalorder %s60, 0
      %s63 = sadd.s32 %s62, 1
      %s64 = scalar_select %p61, %s62, %s63
      %p67 = pneg %p61
      %p68 = scmp.eq.s32.totalorder %s10, 1
      %p69 = por %p67, %p68
      %p70 = scmp.ne.s32.totalorder %s62, %s65
      %p71 = scmp.eq.s32.totalorder %s10, 0
      %p72 = por %p70, %p71
      %p73 = scmp.ne.s32.totalorder %s62, %s65
      %p74 = scmp.eq.s32.totalorder %s15, 1
      %p75 = por %p73, %p74
      %p76 = scmp.ne.s32.totalorder %s65, %s66
      %p77 = scmp.eq.s32.totalorder %s15, 0
      %p78 = por %p76, %p77
      %p79 = scmp.ne.s32.totalorder %s65, %s66
      %p80 = scmp.eq.s32.totalorder %s16, 1
      %p81 = por %p79, %p80
      %p83 = scmp.ne.s32.totalorder %s66, %s82
      %p84 = scmp.eq.s32.totalorder %s16, 0
      %p85 = por %p83, %p84
      %s86 = ssub.s32 %s10, %s17
      %p87 = scmp.eq.s32.totalorder %s86, 0
      %s89 = sadd.s32 %s88, 1
      %s90 = scalar_select %p87, %s88, %s89
      %p93 = pneg %p87
      %p94 = scmp.eq.s32.totalorder %s10, 1
      %p95 = por %p93, %p94
      %p96 = scmp.ne.s32.totalorder %s88, %s91
      %p97 = scmp.eq.s32.totalorder %s10, 0
      %p98 = por %p96, %p97
      %p99 = scmp.ne.s32.totalorder %s88, %s91
      %p100 = scmp.eq.s32.totalorder %s15, 1
      %p101 = por %p99, %p100
      %p102 = scmp.ne.s32.totalorder %s91, %s92
      %p103 = scmp.eq.s32.totalorder %s15, 0
      %p104 = por %p102, %p103
      %p105 = scmp.ne.s32.totalorder %s91, %s92
      %p106 = scmp.eq.s32.totalorder %s16, 1
      %p107 = por %p105, %p106
      %p109 = scmp.ne.s32.totalorder %s92, %s108
      %p110 = scmp.eq.s32.totalorder %s16, 0
      %p111 = por %p109, %p110
      %p112 = scmp.le.s32.totalorder 1, %s10
      %p113 = scmp.lt.s32.totalorder %s10, 3
      %p114 = pnand %p112, %p113
      %p115 = pneg %p114
      // Predicated region
      $region9: #{tpu_custom_call.1} parent=5 // pred_check
        _
      $region10: #{tpu_custom_call.1} parent=5 // pred_check_branch
        %117 = sbr.rel (%p114) target = $region12
      $region11: #{tpu_custom_call.1} parent=5 // pred_region
        %s118 = ssub.s32 %s10, 1
        // Predicated region
        $region13: #{tpu_custom_call.1} parent=11 // pred_check
          %p119 = pneg %p31
        $region14: #{tpu_custom_call.1} parent=11 // pred_check_branch
          %121 = sbr.rel (%p119) target = $region16
        $region15: #{tpu_custom_call.1} parent=11 // pred_region
          %s123 = ssub.s32 7168, 7168
          %124 = vsyncadd [#allocation3], %s123
          %s125 = sshll.u32 [#allocation2], 4
          %s126 = int_to_ptr.vmem [resolvable:$true] %s125
          %131 = dma.hbm_to_vmem [thread:$0]  %s0, 7168, %s126, [#allocation3], 128, 128, 8
        $region16: #{tpu_custom_call.1} parent=11 // pred_fallthru
          _
        // Predicated region
        $region17: #{tpu_custom_call.1} parent=11 // pred_check
          %p132 = pneg %p52
        $region18: #{tpu_custom_call.1} parent=11 // pred_check_branch
          %134 = sbr.rel (%p132) target = $region20
        $region19: #{tpu_custom_call.1} parent=11 // pred_region
          _
        $region20: #{tpu_custom_call.1} parent=11 // pred_fallthru
          _
      $region12: #{tpu_custom_call.1} parent=5 // pred_fallthru
        _
      %p135 = scmp.lt.s32.totalorder %s10, 2
      // Predicated region
      $region21: #{tpu_custom_call.1} parent=5 // pred_check
        %p136 = pneg %p135
      $region22: #{tpu_custom_call.1} parent=5 // pred_check_branch
        %138 = sbr.rel (%p136) target = $region24
      $region23: #{tpu_custom_call.1} parent=5 // pred_region
        // Predicated region
        $region25: #{tpu_custom_call.1} parent=23 // pred_check
          %p139 = pneg %p72
        $region26: #{tpu_custom_call.1} parent=23 // pred_check_branch
          %141 = sbr.rel (%p139) target = $region28
        $region27: #{tpu_custom_call.1} parent=23 // pred_region
          %s142 = smul.u32 2, %s10
          %p143 = scmp.lt.s32.totalorder %s142, 3
          %s144 = scalar_select %p143, %s142, 3
          %s145 = smul.addr %s144, 8
          %s146 = scalar_lea.vmem %s2, %s145
          %s147 = smul.u32 2, %s10
        $region28: #{tpu_custom_call.1} parent=23 // pred_fallthru
          _
      $region24: #{tpu_custom_call.1} parent=5 // pred_fallthru
        _
      %p148 = scmp.le.s32.totalorder 1, %s10
      %p149 = scmp.lt.s32.totalorder %s10, 3
      %p150 = pnand %p148, %p149
      %p151 = pneg %p150
      // Predicated region
      $region29: #{tpu_custom_call.1} parent=5 // pred_check
        _
      $region30: #{tpu_custom_call.1} parent=5 // pred_check_branch
        %153 = sbr.rel (%p150) target = $region32
      $region31: #{tpu_custom_call.1} parent=5 // pred_region
        %s154 = ssub.s32 %s10, 1
        // Predicated region
        $region33: #{tpu_custom_call.1} parent=31 // pred_check
          %p155 = pneg %p31
        $region34: #{tpu_custom_call.1} parent=31 // pred_check_branch
          %157 = sbr.rel (%p155) target = $region36
        $region35: #{tpu_custom_call.1} parent=31 // pred_region
          %158 = dma.done [#allocation3], 7168
        $region36: #{tpu_custom_call.1} parent=31 // pred_fallthru
          _
        %p159 = pneg %p31
        %p160 = pneg %p28
        %p161 = pneg %p52
        %p162 = pneg %p49
        %s163 = smul.u32 2, %s15
        %p164 = scmp.lt.s32.totalorder %s163, 3
        %s165 = scalar_select %p164, %s163, 3
        %s166 = smul.addr %s165, 8
        %s167 = scalar_lea.vmem %s2, %s166
        %p168 = pneg %p78
        %p169 = pneg %p75
        %p170 = pneg %p104
        %p171 = pneg %p101
        %s172 = smul.u32 2, %s15
        %p173 = scmp.lt.s32.totalorder %s172, 3
        %s174 = scalar_select %p173, %s172, 3
        %s175 = smul.addr %s174, 8
        %s176 = scalar_lea.vmem %s3, %s175
        %s177 = smul.u32 2, %s15
        %p178 = scmp.lt.s32.totalorder %s177, 3
        %s179 = scalar_select %p178, %s177, 3
        %s180 = smul.addr %s179, 8
        %s181 = scalar_lea.vmem %s2, %s180
        %s182 = smul.u32 2, %s15
        %s183 = smul.u32 2, %s15
        %p184 = scmp.lt.s32.totalorder %s183, 3
        %s185 = scalar_select %p184, %s183, 3
        %s186 = smul.addr %s185, 8
        %s187 = scalar_lea.vmem %s3, %s186
        %s188 = smul.u32 2, %s15
        %v189 = vld [vmem:[%s181] sm:$0xff]
        %v190 = vld [vmem:[%s181 + $0x8] sm:$0xff]
        %v191 = vld [vmem:[#allocation2] sm:$0xff]
        %v192 = vld [vmem:[%s1] sm:$0x1]
        %v194 = vlaneseq
        %v195 = vshrl.u32 %v194, 7
        %v196 = vsub.s32 0, %v195
        %v197 = vrot.slane %v192, %v196
        %vm199 = vcmask 64512
        %v201 = vsel %vm199, %v189, 0
        %v204 = vsel %vm199, %v190, 0
        %206 = vmatprep.subr.mxu0 0.0
        %207 = vmatpush1.msra.mxu0 0.0
        %208 = vmatprep.subr.mxu0 0.0
        %209 = vmatpush1.msra.mxu0 0.0
        %210 = vmatprep.subr.mxu0 0.0
        %211 = vmatpush1.msra.mxu0 0.0
        %212 = vmatprep.subr.mxu0 0.0
        %213 = vmatpush1.msra.mxu0 0.0
        %214 = vmatprep.subr.mxu0 0.0
        %215 = vmatpush1.msra.mxu0 0.0
        %216 = vmatprep.subr.mxu0 0.0
        %217 = vmatpush1.msra.mxu0 0.0
        %218 = vmatprep.subr.mxu0 0.0
        %219 = vmatpush1.msra.mxu0 0.0
        %220 = vmatprep.subr.mxu0 0.0
        %221 = vmatpush1.msra.mxu0 0.0
        %222 = vmatprep.subr.mxu0 0.0
        %223 = vmatpush1.msra.mxu0 0.0
        %224 = vmatprep.subr.mxu0 0.0
        %225 = vmatpush1.msra.mxu0 0.0
        %226 = vmatprep.subr.mxu0 0.0
        %227 = vmatpush1.msra.mxu0 0.0
        %228 = vmatprep.subr.mxu0 0.0
        %229 = vmatpush1.msra.mxu0 0.0
        %230 = vmatprep.subr.mxu0 0.0
        %231 = vmatpush1.msra.mxu0 0.0
        %232 = vmatprep.subr.mxu0 0.0
        %233 = vmatpush1.msra.mxu0 0.0
        %234 = vmatprep.subr.mxu0 0.0
        %235 = vmatpush1.msra.mxu0 0.0
        %236 = vmatprep.subr.mxu0 0.0
        %237 = vmatpush1.msra.mxu0 %v191
        %238 = vmatprep.subr.mxu0 0.0
        %239 = vmatpush2.msra.mxu0 0.0
        %240 = vmatprep.subr.mxu0 0.0
        %241 = vmatpush2.msra.mxu0 0.0
        %242 = vmatprep.subr.mxu0 0.0
        %243 = vmatpush2.msra.mxu0 0.0
        %244 = vmatprep.subr.mxu0 0.0
        %245 = vmatpush2.msra.mxu0 0.0
        %246 = vmatprep.subr.mxu0 0.0
        %247 = vmatpush2.msra.mxu0 0.0
        %248 = vmatprep.subr.mxu0 0.0
        %249 = vmatpush2.msra.mxu0 0.0
        %250 = vmatprep.subr.mxu0 0.0
        %251 = vmatpush2.msra.mxu0 0.0
        %252 = vmatprep.subr.mxu0 0.0
        %253 = vmatpush2.msra.mxu0 0.0
        %254 = vmatprep.subr.mxu0 0.0
        %255 = vmatpush2.msra.mxu0 0.0
        %256 = vmatprep.subr.mxu0 0.0
        %257 = vmatpush2.msra.mxu0 0.0
        %258 = vmatprep.subr.mxu0 0.0
        %259 = vmatpush2.msra.mxu0 0.0
        %260 = vmatprep.subr.mxu0 0.0
        %261 = vmatpush2.msra.mxu0 0.0
        %262 = vmatprep.subr.mxu0 0.0
        %263 = vmatpush2.msra.mxu0 0.0
        %264 = vmatprep.subr.mxu0 0.0
        %265 = vmatpush2.msra.mxu0 0.0
        %266 = vmatprep.subr.mxu0 0.0
        %267 = vmatpush2.msra.mxu0 0.0
        %268 = vmatprep.subr.mxu0 0.0
        %269 = vmatpush2.msra.mxu0 0.0
        %270 = vmatprep.mubr.f32.mxu0 0.0
        %271 = vmatmul.mubr.f32.gmra.mxu0 %v201
        %v272 = vpop.f32.mrf.mxu0
        %v273 = vadd.f32 %v197, %v272
        %v274 = vpop.f32.mrf.mxu0
        %275 = vmatprep.mubr.f32.mxu0 0.0
        %276 = vmatmul.mubr.f32.gmra.mxu0 %v204
        %v277 = vpop.f32.mrf.mxu0
        %v278 = vadd.f32 %v197, %v277
        %v279 = vpop.f32.mrf.mxu0
        %280 = vdwg.mxu0
        %v281 = vmax.f32 %v273, 0.0
        %v282 = vmax.f32 %v278, 0.0
        %s283 = scalar_lea.vmem [#allocation2], 64
        %v284 = vld [vmem:[%s283] sm:$0xff]
        %v285 = vld [vmem:[%s283 + $0x8] sm:$0xff]
        %v286 = vld [vmem:[%s283 + $0x10] sm:$0xff]
        %v287 = vld [vmem:[%s283 + $0x18] sm:$0xff]
        %v288 = vld [vmem:[%s283 + $0x20] sm:$0xff]
        %v289 = vld [vmem:[%s283 + $0x28] sm:$0xff]
        %v290 = vld [vmem:[%s283 + $0x30] sm:$0xff]
        %v291 = vld [vmem:[%s283 + $0x38] sm:$0xff]
        %s292 = scalar_lea.vmem %s1, 1
        %v293 = vld [vmem:[%s292] sm:$0x1]
        %v295 = vlaneseq
        %v296 = vshrl.u32 %v295, 7
        %v297 = vsub.s32 0, %v296
        %v298 = vrot.slane %v293, %v297
        %vm300 = vcmask 523264
        %v302 = vsel %vm300, %v281, 0
        %v305 = vsel %vm300, %v282, 0
        %307 = vmatprep.subr.mxu0 0.0
        %308 = vmatpush1.msra.mxu0 0.0
        %309 = vmatprep.subr.mxu0 0.0
        %310 = vmatpush1.msra.mxu0 0.0
        %311 = vmatprep.subr.mxu0 0.0
        %312 = vmatpush1.msra.mxu0 0.0
        %313 = vmatprep.subr.mxu0 0.0
        %314 = vmatpush1.msra.mxu0 0.0
        %315 = vmatprep.subr.mxu0 0.0
        %316 = vmatpush1.msra.mxu0 0.0
        %317 = vmatprep.subr.mxu0 0.0
        %318 = vmatpush1.msra.mxu0 0.0
        %319 = vmatprep.subr.mxu0 0.0
        %320 = vmatpush1.msra.mxu0 0.0
        %321 = vmatprep.subr.mxu0 0.0
        %322 = vmatpush1.msra.mxu0 0.0
        %323 = vmatprep.subr.mxu0 0.0
        %324 = vmatpush1.msra.mxu0 %v291
        %325 = vmatprep.subr.mxu0 0.0
        %326 = vmatpush1.msra.mxu0 %v290
        %327 = vmatprep.subr.mxu0 0.0
        %328 = vmatpush1.msra.mxu0 %v289
        %329 = vmatprep.subr.mxu0 0.0
        %330 = vmatpush1.msra.mxu0 %v288
        %331 = vmatprep.subr.mxu0 0.0
        %332 = vmatpush1.msra.mxu0 %v287
        %333 = vmatprep.subr.mxu0 0.0
        %334 = vmatpush1.msra.mxu0 %v286
        %335 = vmatprep.subr.mxu0 0.0
        %336 = vmatpush1.msra.mxu0 %v285
        %337 = vmatprep.subr.mxu0 0.0
        %338 = vmatpush1.msra.mxu0 %v284
        %339 = vmatprep.subr.mxu0 0.0
        %340 = vmatpush2.msra.mxu0 0.0
        %341 = vmatprep.subr.mxu0 0.0
        %342 = vmatpush2.msra.mxu0 0.0
        %343 = vmatprep.subr.mxu0 0.0
        %344 = vmatpush2.msra.mxu0 0.0
        %345 = vmatprep.subr.mxu0 0.0
        %346 = vmatpush2.msra.mxu0 0.0
        %347 = vmatprep.subr.mxu0 0.0
        %348 = vmatpush2.msra.mxu0 0.0
        %349 = vmatprep.subr.mxu0 0.0
        %350 = vmatpush2.msra.mxu0 0.0
        %351 = vmatprep.subr.mxu0 0.0
        %352 = vmatpush2.msra.mxu0 0.0
        %353 = vmatprep.subr.mxu0 0.0
        %354 = vmatpush2.msra.mxu0 0.0
        %355 = vmatprep.subr.mxu0 0.0
        %356 = vmatpush2.msra.mxu0 0.0
        %357 = vmatprep.subr.mxu0 0.0
        %358 = vmatpush2.msra.mxu0 0.0
        %359 = vmatprep.subr.mxu0 0.0
        %360 = vmatpush2.msra.mxu0 0.0
        %361 = vmatprep.subr.mxu0 0.0
        %362 = vmatpush2.msra.mxu0 0.0
        %363 = vmatprep.subr.mxu0 0.0
        %364 = vmatpush2.msra.mxu0 0.0
        %365 = vmatprep.subr.mxu0 0.0
        %366 = vmatpush2.msra.mxu0 0.0
        %367 = vmatprep.subr.mxu0 0.0
        %368 = vmatpush2.msra.mxu0 0.0
        %369 = vmatprep.subr.mxu0 0.0
        %370 = vmatpush2.msra.mxu0 0.0
        %371 = vmatprep.mubr.f32.mxu0 0.0
        %372 = vmatmul.mubr.f32.gmra.mxu0 %v302
        %v373 = vpop.f32.mrf.mxu0
        %v374 = vadd.f32 %v298, %v373
        %v375 = vpop.f32.mrf.mxu0
        %376 = vmatprep.mubr.f32.mxu0 0.0
        %377 = vmatmul.mubr.f32.gmra.mxu0 %v305
        %v378 = vpop.f32.mrf.mxu0
        %v379 = vadd.f32 %v298, %v378
        %v380 = vpop.f32.mrf.mxu0
        %381 = vdwg.mxu0
        %v382 = vmax.f32 %v374, 0.0
        %v383 = vmax.f32 %v379, 0.0
        %s384 = scalar_lea.vmem [#allocation2], 128
        %v385 = vld [vmem:[%s384] sm:$0xff]
        %v386 = vld [vmem:[%s384 + $0x8] sm:$0xff]
        %v387 = vld [vmem:[%s384 + $0x10] sm:$0xff]
        %v388 = vld [vmem:[%s384 + $0x18] sm:$0xff]
        %v389 = vld [vmem:[%s384 + $0x20] sm:$0xff]
        %v390 = vld [vmem:[%s384 + $0x28] sm:$0xff]
        %v391 = vld [vmem:[%s384 + $0x30] sm:$0xff]
        %v392 = vld [vmem:[%s384 + $0x38] sm:$0xff]
        %s393 = scalar_lea.vmem %s1, 2
        %v394 = vld [vmem:[%s393] sm:$0x1]
        %v396 = vlaneseq
        %v397 = vshrl.u32 %v396, 7
        %v398 = vsub.s32 0, %v397
        %v399 = vrot.slane %v394, %v398
        %v402 = vsel %vm300, %v382, 0
        %v405 = vsel %vm300, %v383, 0
        %407 = vmatprep.subr.mxu0 0.0
        %408 = vmatpush1.msra.mxu0 0.0
        %409 = vmatprep.subr.mxu0 0.0
        %410 = vmatpush1.msra.mxu0 0.0
        %411 = vmatprep.subr.mxu0 0.0
        %412 = vmatpush1.msra.mxu0 0.0
        %413 = vmatprep.subr.mxu0 0.0
        %414 = vmatpush1.msra.mxu0 0.0
        %415 = vmatprep.subr.mxu0 0.0
        %416 = vmatpush1.msra.mxu0 0.0
        %417 = vmatprep.subr.mxu0 0.0
        %418 = vmatpush1.msra.mxu0 0.0
        %419 = vmatprep.subr.mxu0 0.0
        %420 = vmatpush1.msra.mxu0 0.0
        %421 = vmatprep.subr.mxu0 0.0
        %422 = vmatpush1.msra.mxu0 0.0
        %423 = vmatprep.subr.mxu0 0.0
        %424 = vmatpush1.msra.mxu0 %v392
        %425 = vmatprep.subr.mxu0 0.0
        %426 = vmatpush1.msra.mxu0 %v391
        %427 = vmatprep.subr.mxu0 0.0
        %428 = vmatpush1.msra.mxu0 %v390
        %429 = vmatprep.subr.mxu0 0.0
        %430 = vmatpush1.msra.mxu0 %v389
        %431 = vmatprep.subr.mxu0 0.0
        %432 = vmatpush1.msra.mxu0 %v388
        %433 = vmatprep.subr.mxu0 0.0
        %434 = vmatpush1.msra.mxu0 %v387
        %435 = vmatprep.subr.mxu0 0.0
        %436 = vmatpush1.msra.mxu0 %v386
        %437 = vmatprep.subr.mxu0 0.0
        %438 = vmatpush1.msra.mxu0 %v385
        %439 = vmatprep.subr.mxu0 0.0
        %440 = vmatpush2.msra.mxu0 0.0
        %441 = vmatprep.subr.mxu0 0.0
        %442 = vmatpush2.msra.mxu0 0.0
        %443 = vmatprep.subr.mxu0 0.0
        %444 = vmatpush2.msra.mxu0 0.0
        %445 = vmatprep.subr.mxu0 0.0
        %446 = vmatpush2.msra.mxu0 0.0
        %447 = vmatprep.subr.mxu0 0.0
        %448 = vmatpush2.msra.mxu0 0.0
        %449 = vmatprep.subr.mxu0 0.0
        %450 = vmatpush2.msra.mxu0 0.0
        %451 = vmatprep.subr.mxu0 0.0
        %452 = vmatpush2.msra.mxu0 0.0
        %453 = vmatprep.subr.mxu0 0.0
        %454 = vmatpush2.msra.mxu0 0.0
        %455 = vmatprep.subr.mxu0 0.0
        %456 = vmatpush2.msra.mxu0 0.0
        %457 = vmatprep.subr.mxu0 0.0
        %458 = vmatpush2.msra.mxu0 0.0
        %459 = vmatprep.subr.mxu0 0.0
        %460 = vmatpush2.msra.mxu0 0.0
        %461 = vmatprep.subr.mxu0 0.0
        %462 = vmatpush2.msra.mxu0 0.0
        %463 = vmatprep.subr.mxu0 0.0
        %464 = vmatpush2.msra.mxu0 0.0
        %465 = vmatprep.subr.mxu0 0.0
        %466 = vmatpush2.msra.mxu0 0.0
        %467 = vmatprep.subr.mxu0 0.0
        %468 = vmatpush2.msra.mxu0 0.0
        %469 = vmatprep.subr.mxu0 0.0
        %470 = vmatpush2.msra.mxu0 0.0
        %471 = vmatprep.mubr.f32.mxu0 0.0
        %472 = vmatmul.mubr.f32.gmra.mxu0 %v402
        %v473 = vpop.f32.mrf.mxu0
        %v474 = vadd.f32 %v399, %v473
        %v475 = vpop.f32.mrf.mxu0
        %476 = vmatprep.mubr.f32.mxu0 0.0
        %477 = vmatmul.mubr.f32.gmra.mxu0 %v405
        %v478 = vpop.f32.mrf.mxu0
        %v479 = vadd.f32 %v399, %v478
        %v480 = vpop.f32.mrf.mxu0
        %481 = vdwg.mxu0
        %v482 = vmax.f32 %v474, 0.0
        %v483 = vmax.f32 %v479, 0.0
        %s484 = scalar_lea.vmem [#allocation2], 192
        %v485 = vld [vmem:[%s484] sm:$0xff]
        %v486 = vld [vmem:[%s484 + $0x8] sm:$0xff]
        %v487 = vld [vmem:[%s484 + $0x10] sm:$0xff]
        %v488 = vld [vmem:[%s484 + $0x18] sm:$0xff]
        %v489 = vld [vmem:[%s484 + $0x20] sm:$0xff]
        %v490 = vld [vmem:[%s484 + $0x28] sm:$0xff]
        %v491 = vld [vmem:[%s484 + $0x30] sm:$0xff]
        %v492 = vld [vmem:[%s484 + $0x38] sm:$0xff]
        %s493 = scalar_lea.vmem %s1, 3
        %v494 = vld [vmem:[%s493] sm:$0x1]
        %v496 = vlaneseq
        %v497 = vshrl.u32 %v496, 7
        %v498 = vsub.s32 0, %v497
        %v499 = vrot.slane %v494, %v498
        %v502 = vsel %vm300, %v482, 0
        %v505 = vsel %vm300, %v483, 0
        %507 = vmatprep.subr.mxu0 0.0
        %508 = vmatpush1.msra.mxu0 0.0
        %509 = vmatprep.subr.mxu0 0.0
        %510 = vmatpush1.msra.mxu0 0.0
        %511 = vmatprep.subr.mxu0 0.0
        %512 = vmatpush1.msra.mxu0 0.0
        %513 = vmatprep.subr.mxu0 0.0
        %514 = vmatpush1.msra.mxu0 0.0
        %515 = vmatprep.subr.mxu0 0.0
        %516 = vmatpush1.msra.mxu0 0.0
        %517 = vmatprep.subr.mxu0 0.0
        %518 = vmatpush1.msra.mxu0 0.0
        %519 = vmatprep.subr.mxu0 0.0
        %520 = vmatpush1.msra.mxu0 0.0
        %521 = vmatprep.subr.mxu0 0.0
        %522 = vmatpush1.msra.mxu0 0.0
        %523 = vmatprep.subr.mxu0 0.0
        %524 = vmatpush1.msra.mxu0 %v492
        %525 = vmatprep.subr.mxu0 0.0
        %526 = vmatpush1.msra.mxu0 %v491
        %527 = vmatprep.subr.mxu0 0.0
        %528 = vmatpush1.msra.mxu0 %v490
        %529 = vmatprep.subr.mxu0 0.0
        %530 = vmatpush1.msra.mxu0 %v489
        %531 = vmatprep.subr.mxu0 0.0
        %532 = vmatpush1.msra.mxu0 %v488
        %533 = vmatprep.subr.mxu0 0.0
        %534 = vmatpush1.msra.mxu0 %v487
        %535 = vmatprep.subr.mxu0 0.0
        %536 = vmatpush1.msra.mxu0 %v486
        %537 = vmatprep.subr.mxu0 0.0
        %538 = vmatpush1.msra.mxu0 %v485
        %539 = vmatprep.subr.mxu0 0.0
        %540 = vmatpush2.msra.mxu0 0.0
        %541 = vmatprep.subr.mxu0 0.0
        %542 = vmatpush2.msra.mxu0 0.0
        %543 = vmatprep.subr.mxu0 0.0
        %544 = vmatpush2.msra.mxu0 0.0
        %545 = vmatprep.subr.mxu0 0.0
        %546 = vmatpush2.msra.mxu0 0.0
        %547 = vmatprep.subr.mxu0 0.0
        %548 = vmatpush2.msra.mxu0 0.0
        %549 = vmatprep.subr.mxu0 0.0
        %550 = vmatpush2.msra.mxu0 0.0
        %551 = vmatprep.subr.mxu0 0.0
        %552 = vmatpush2.msra.mxu0 0.0
        %553 = vmatprep.subr.mxu0 0.0
        %554 = vmatpush2.msra.mxu0 0.0
        %555 = vmatprep.subr.mxu0 0.0
        %556 = vmatpush2.msra.mxu0 0.0
        %557 = vmatprep.subr.mxu0 0.0
        %558 = vmatpush2.msra.mxu0 0.0
        %559 = vmatprep.subr.mxu0 0.0
        %560 = vmatpush2.msra.mxu0 0.0
        %561 = vmatprep.subr.mxu0 0.0
        %562 = vmatpush2.msra.mxu0 0.0
        %563 = vmatprep.subr.mxu0 0.0
        %564 = vmatpush2.msra.mxu0 0.0
        %565 = vmatprep.subr.mxu0 0.0
        %566 = vmatpush2.msra.mxu0 0.0
        %567 = vmatprep.subr.mxu0 0.0
        %568 = vmatpush2.msra.mxu0 0.0
        %569 = vmatprep.subr.mxu0 0.0
        %570 = vmatpush2.msra.mxu0 0.0
        %571 = vmatprep.mubr.f32.mxu0 0.0
        %572 = vmatmul.mubr.f32.gmra.mxu0 %v502
        %v573 = vpop.f32.mrf.mxu0
        %v574 = vadd.f32 %v499, %v573
        %v575 = vpop.f32.mrf.mxu0
        %576 = vmatprep.mubr.f32.mxu0 0.0
        %577 = vmatmul.mubr.f32.gmra.mxu0 %v505
        %v578 = vpop.f32.mrf.mxu0
        %v579 = vadd.f32 %v499, %v578
        %v580 = vpop.f32.mrf.mxu0
        %581 = vdwg.mxu0
        %v582 = vmax.f32 %v574, 0.0
        %v583 = vmax.f32 %v579, 0.0
        %s584 = scalar_lea.vmem [#allocation2], 256
        %v585 = vld [vmem:[%s584] sm:$0xff]
        %v586 = vld [vmem:[%s584 + $0x8] sm:$0xff]
        %v587 = vld [vmem:[%s584 + $0x10] sm:$0xff]
        %v588 = vld [vmem:[%s584 + $0x18] sm:$0xff]
        %v589 = vld [vmem:[%s584 + $0x20] sm:$0xff]
        %v590 = vld [vmem:[%s584 + $0x28] sm:$0xff]
        %v591 = vld [vmem:[%s584 + $0x30] sm:$0xff]
        %v592 = vld [vmem:[%s584 + $0x38] sm:$0xff]
        %s593 = scalar_lea.vmem %s1, 4
        %v594 = vld [vmem:[%s593] sm:$0x1]
        %v596 = vlaneseq
        %v597 = vshrl.u32 %v596, 7
        %v598 = vsub.s32 0, %v597
        %v599 = vrot.slane %v594, %v598
        %v602 = vsel %vm300, %v582, 0
        %v605 = vsel %vm300, %v583, 0
        %607 = vmatprep.subr.mxu0 0.0
        %608 = vmatpush1.msra.mxu0 0.0
        %609 = vmatprep.subr.mxu0 0.0
        %610 = vmatpush1.msra.mxu0 0.0
        %611 = vmatprep.subr.mxu0 0.0
        %612 = vmatpush1.msra.mxu0 0.0
        %613 = vmatprep.subr.mxu0 0.0
        %614 = vmatpush1.msra.mxu0 0.0
        %615 = vmatprep.subr.mxu0 0.0
        %616 = vmatpush1.msra.mxu0 0.0
        %617 = vmatprep.subr.mxu0 0.0
        %618 = vmatpush1.msra.mxu0 0.0
        %619 = vmatprep.subr.mxu0 0.0
        %620 = vmatpush1.msra.mxu0 0.0
        %621 = vmatprep.subr.mxu0 0.0
        %622 = vmatpush1.msra.mxu0 0.0
        %623 = vmatprep.subr.mxu0 0.0
        %624 = vmatpush1.msra.mxu0 %v592
        %625 = vmatprep.subr.mxu0 0.0
        %626 = vmatpush1.msra.mxu0 %v591
        %627 = vmatprep.subr.mxu0 0.0
        %628 = vmatpush1.msra.mxu0 %v590
        %629 = vmatprep.subr.mxu0 0.0
        %630 = vmatpush1.msra.mxu0 %v589
        %631 = vmatprep.subr.mxu0 0.0
        %632 = vmatpush1.msra.mxu0 %v588
        %633 = vmatprep.subr.mxu0 0.0
        %634 = vmatpush1.msra.mxu0 %v587
        %635 = vmatprep.subr.mxu0 0.0
        %636 = vmatpush1.msra.mxu0 %v586
        %637 = vmatprep.subr.mxu0 0.0
        %638 = vmatpush1.msra.mxu0 %v585
        %639 = vmatprep.subr.mxu0 0.0
        %640 = vmatpush2.msra.mxu0 0.0
        %641 = vmatprep.subr.mxu0 0.0
        %642 = vmatpush2.msra.mxu0 0.0
        %643 = vmatprep.subr.mxu0 0.0
        %644 = vmatpush2.msra.mxu0 0.0
        %645 = vmatprep.subr.mxu0 0.0
        %646 = vmatpush2.msra.mxu0 0.0
        %647 = vmatprep.subr.mxu0 0.0
        %648 = vmatpush2.msra.mxu0 0.0
        %649 = vmatprep.subr.mxu0 0.0
        %650 = vmatpush2.msra.mxu0 0.0
        %651 = vmatprep.subr.mxu0 0.0
        %652 = vmatpush2.msra.mxu0 0.0
        %653 = vmatprep.subr.mxu0 0.0
        %654 = vmatpush2.msra.mxu0 0.0
        %655 = vmatprep.subr.mxu0 0.0
        %656 = vmatpush2.msra.mxu0 0.0
        %657 = vmatprep.subr.mxu0 0.0
        %658 = vmatpush2.msra.mxu0 0.0
        %659 = vmatprep.subr.mxu0 0.0
        %660 = vmatpush2.msra.mxu0 0.0
        %661 = vmatprep.subr.mxu0 0.0
        %662 = vmatpush2.msra.mxu0 0.0
        %663 = vmatprep.subr.mxu0 0.0
        %664 = vmatpush2.msra.mxu0 0.0
        %665 = vmatprep.subr.mxu0 0.0
        %666 = vmatpush2.msra.mxu0 0.0
        %667 = vmatprep.subr.mxu0 0.0
        %668 = vmatpush2.msra.mxu0 0.0
        %669 = vmatprep.subr.mxu0 0.0
        %670 = vmatpush2.msra.mxu0 0.0
        %671 = vmatprep.mubr.f32.mxu0 0.0
        %672 = vmatmul.mubr.f32.gmra.mxu0 %v602
        %v673 = vpop.f32.mrf.mxu0
        %v674 = vadd.f32 %v599, %v673
        %v675 = vpop.f32.mrf.mxu0
        %676 = vmatprep.mubr.f32.mxu0 0.0
        %677 = vmatmul.mubr.f32.gmra.mxu0 %v605
        %v678 = vpop.f32.mrf.mxu0
        %v679 = vadd.f32 %v599, %v678
        %v680 = vpop.f32.mrf.mxu0
        %681 = vdwg.mxu0
        %v682 = vmax.f32 %v674, 0.0
        %v683 = vmax.f32 %v679, 0.0
        %s684 = scalar_lea.vmem [#allocation2], 320
        %v685 = vld [vmem:[%s684] sm:$0xff]
        %v686 = vld [vmem:[%s684 + $0x8] sm:$0xff]
        %v687 = vld [vmem:[%s684 + $0x10] sm:$0xff]
        %v688 = vld [vmem:[%s684 + $0x18] sm:$0xff]
        %v689 = vld [vmem:[%s684 + $0x20] sm:$0xff]
        %v690 = vld [vmem:[%s684 + $0x28] sm:$0xff]
        %v691 = vld [vmem:[%s684 + $0x30] sm:$0xff]
        %v692 = vld [vmem:[%s684 + $0x38] sm:$0xff]
        %s693 = scalar_lea.vmem %s1, 5
        %v694 = vld [vmem:[%s693] sm:$0x1]
        %v696 = vlaneseq
        %v697 = vshrl.u32 %v696, 7
        %v698 = vsub.s32 0, %v697
        %v699 = vrot.slane %v694, %v698
        %v702 = vsel %vm300, %v682, 0
        %v705 = vsel %vm300, %v683, 0
        %707 = vmatprep.subr.mxu0 0.0
        %708 = vmatpush1.msra.mxu0 0.0
        %709 = vmatprep.subr.mxu0 0.0
        %710 = vmatpush1.msra.mxu0 0.0
        %711 = vmatprep.subr.mxu0 0.0
        %712 = vmatpush1.msra.mxu0 0.0
        %713 = vmatprep.subr.mxu0 0.0
        %714 = vmatpush1.msra.mxu0 0.0
        %715 = vmatprep.subr.mxu0 0.0
        %716 = vmatpush1.msra.mxu0 0.0
        %717 = vmatprep.subr.mxu0 0.0
        %718 = vmatpush1.msra.mxu0 0.0
        %719 = vmatprep.subr.mxu0 0.0
        %720 = vmatpush1.msra.mxu0 0.0
        %721 = vmatprep.subr.mxu0 0.0
        %722 = vmatpush1.msra.mxu0 0.0
        %723 = vmatprep.subr.mxu0 0.0
        %724 = vmatpush1.msra.mxu0 %v692
        %725 = vmatprep.subr.mxu0 0.0
        %726 = vmatpush1.msra.mxu0 %v691
        %727 = vmatprep.subr.mxu0 0.0
        %728 = vmatpush1.msra.mxu0 %v690
        %729 = vmatprep.subr.mxu0 0.0
        %730 = vmatpush1.msra.mxu0 %v689
        %731 = vmatprep.subr.mxu0 0.0
        %732 = vmatpush1.msra.mxu0 %v688
        %733 = vmatprep.subr.mxu0 0.0
        %734 = vmatpush1.msra.mxu0 %v687
        %735 = vmatprep.subr.mxu0 0.0
        %736 = vmatpush1.msra.mxu0 %v686
        %737 = vmatprep.subr.mxu0 0.0
        %738 = vmatpush1.msra.mxu0 %v685
        %739 = vmatprep.subr.mxu0 0.0
        %740 = vmatpush2.msra.mxu0 0.0
        %741 = vmatprep.subr.mxu0 0.0
        %742 = vmatpush2.msra.mxu0 0.0
        %743 = vmatprep.subr.mxu0 0.0
        %744 = vmatpush2.msra.mxu0 0.0
        %745 = vmatprep.subr.mxu0 0.0
        %746 = vmatpush2.msra.mxu0 0.0
        %747 = vmatprep.subr.mxu0 0.0
        %748 = vmatpush2.msra.mxu0 0.0
        %749 = vmatprep.subr.mxu0 0.0
        %750 = vmatpush2.msra.mxu0 0.0
        %751 = vmatprep.subr.mxu0 0.0
        %752 = vmatpush2.msra.mxu0 0.0
        %753 = vmatprep.subr.mxu0 0.0
        %754 = vmatpush2.msra.mxu0 0.0
        %755 = vmatprep.subr.mxu0 0.0
        %756 = vmatpush2.msra.mxu0 0.0
        %757 = vmatprep.subr.mxu0 0.0
        %758 = vmatpush2.msra.mxu0 0.0
        %759 = vmatprep.subr.mxu0 0.0
        %760 = vmatpush2.msra.mxu0 0.0
        %761 = vmatprep.subr.mxu0 0.0
        %762 = vmatpush2.msra.mxu0 0.0
        %763 = vmatprep.subr.mxu0 0.0
        %764 = vmatpush2.msra.mxu0 0.0
        %765 = vmatprep.subr.mxu0 0.0
        %766 = vmatpush2.msra.mxu0 0.0
        %767 = vmatprep.subr.mxu0 0.0
        %768 = vmatpush2.msra.mxu0 0.0
        %769 = vmatprep.subr.mxu0 0.0
        %770 = vmatpush2.msra.mxu0 0.0
        %771 = vmatprep.mubr.f32.mxu0 0.0
        %772 = vmatmul.mubr.f32.gmra.mxu0 %v702
        %v773 = vpop.f32.mrf.mxu0
        %v774 = vadd.f32 %v699, %v773
        %v775 = vpop.f32.mrf.mxu0
        %776 = vmatprep.mubr.f32.mxu0 0.0
        %777 = vmatmul.mubr.f32.gmra.mxu0 %v705
        %v778 = vpop.f32.mrf.mxu0
        %v779 = vadd.f32 %v699, %v778
        %v780 = vpop.f32.mrf.mxu0
        %781 = vdwg.mxu0
        %v782 = vmax.f32 %v774, 0.0
        %v783 = vmax.f32 %v779, 0.0
        %s784 = scalar_lea.vmem [#allocation2], 384
        %v785 = vld [vmem:[%s784] sm:$0xff]
        %v786 = vld [vmem:[%s784 + $0x8] sm:$0xff]
        %v787 = vld [vmem:[%s784 + $0x10] sm:$0xff]
        %v788 = vld [vmem:[%s784 + $0x18] sm:$0xff]
        %v789 = vld [vmem:[%s784 + $0x20] sm:$0xff]
        %v790 = vld [vmem:[%s784 + $0x28] sm:$0xff]
        %v791 = vld [vmem:[%s784 + $0x30] sm:$0xff]
        %v792 = vld [vmem:[%s784 + $0x38] sm:$0xff]
        %s793 = scalar_lea.vmem %s1, 6
        %v794 = vld [vmem:[%s793] sm:$0x1]
        %v796 = vlaneseq
        %v797 = vshrl.u32 %v796, 7
        %v798 = vsub.s32 0, %v797
        %v799 = vrot.slane %v794, %v798
        %v802 = vsel %vm300, %v782, 0
        %v805 = vsel %vm300, %v783, 0
        %807 = vmatprep.subr.mxu0 0.0
        %808 = vmatpush1.msra.mxu0 0.0
        %809 = vmatprep.subr.mxu0 0.0
        %810 = vmatpush1.msra.mxu0 0.0
        %811 = vmatprep.subr.mxu0 0.0
        %812 = vmatpush1.msra.mxu0 0.0
        %813 = vmatprep.subr.mxu0 0.0
        %814 = vmatpush1.msra.mxu0 0.0
        %815 = vmatprep.subr.mxu0 0.0
        %816 = vmatpush1.msra.mxu0 0.0
        %817 = vmatprep.subr.mxu0 0.0
        %818 = vmatpush1.msra.mxu0 0.0
        %819 = vmatprep.subr.mxu0 0.0
        %820 = vmatpush1.msra.mxu0 0.0
        %821 = vmatprep.subr.mxu0 0.0
        %822 = vmatpush1.msra.mxu0 0.0
        %823 = vmatprep.subr.mxu0 0.0
        %824 = vmatpush1.msra.mxu0 %v792
        %825 = vmatprep.subr.mxu0 0.0
        %826 = vmatpush1.msra.mxu0 %v791
        %827 = vmatprep.subr.mxu0 0.0
        %828 = vmatpush1.msra.mxu0 %v790
        %829 = vmatprep.subr.mxu0 0.0
        %830 = vmatpush1.msra.mxu0 %v789
        %831 = vmatprep.subr.mxu0 0.0
        %832 = vmatpush1.msra.mxu0 %v788
        %833 = vmatprep.subr.mxu0 0.0
        %834 = vmatpush1.msra.mxu0 %v787
        %835 = vmatprep.subr.mxu0 0.0
        %836 = vmatpush1.msra.mxu0 %v786
        %837 = vmatprep.subr.mxu0 0.0
        %838 = vmatpush1.msra.mxu0 %v785
        %839 = vmatprep.subr.mxu0 0.0
        %840 = vmatpush2.msra.mxu0 0.0
        %841 = vmatprep.subr.mxu0 0.0
        %842 = vmatpush2.msra.mxu0 0.0
        %843 = vmatprep.subr.mxu0 0.0
        %844 = vmatpush2.msra.mxu0 0.0
        %845 = vmatprep.subr.mxu0 0.0
        %846 = vmatpush2.msra.mxu0 0.0
        %847 = vmatprep.subr.mxu0 0.0
        %848 = vmatpush2.msra.mxu0 0.0
        %849 = vmatprep.subr.mxu0 0.0
        %850 = vmatpush2.msra.mxu0 0.0
        %851 = vmatprep.subr.mxu0 0.0
        %852 = vmatpush2.msra.mxu0 0.0
        %853 = vmatprep.subr.mxu0 0.0
        %854 = vmatpush2.msra.mxu0 0.0
        %855 = vmatprep.subr.mxu0 0.0
        %856 = vmatpush2.msra.mxu0 0.0
        %857 = vmatprep.subr.mxu0 0.0
        %858 = vmatpush2.msra.mxu0 0.0
        %859 = vmatprep.subr.mxu0 0.0
        %860 = vmatpush2.msra.mxu0 0.0
        %861 = vmatprep.subr.mxu0 0.0
        %862 = vmatpush2.msra.mxu0 0.0
        %863 = vmatprep.subr.mxu0 0.0
        %864 = vmatpush2.msra.mxu0 0.0
        %865 = vmatprep.subr.mxu0 0.0
        %866 = vmatpush2.msra.mxu0 0.0
        %867 = vmatprep.subr.mxu0 0.0
        %868 = vmatpush2.msra.mxu0 0.0
        %869 = vmatprep.subr.mxu0 0.0
        %870 = vmatpush2.msra.mxu0 0.0
        %871 = vmatprep.mubr.f32.mxu0 0.0
        %872 = vmatmul.mubr.f32.gmra.mxu0 %v802
        %v873 = vpop.f32.mrf.mxu0
        %v874 = vadd.f32 %v799, %v873
        %v875 = vpop.f32.mrf.mxu0
        %876 = vmatprep.mubr.f32.mxu0 0.0
        %877 = vmatmul.mubr.f32.gmra.mxu0 %v805
        %v878 = vpop.f32.mrf.mxu0
        %v879 = vadd.f32 %v799, %v878
        %v880 = vpop.f32.mrf.mxu0
        %881 = vdwg.mxu0
        %882 = vst.msk [vmem:[%s187] sm:$0xff] %vm199, %v874
        %883 = vst.msk [vmem:[%s187 + $0x8] sm:$0xff] %vm199, %v879
        %s884 = smul.u32 2, %s15
        %p885 = scmp.lt.s32.totalorder %s884, 3
        %s886 = scalar_select %p885, %s884, 3
        %s887 = smul.addr %s886, 8
        %s888 = scalar_lea.vmem %s3, %s887
        // Predicated region
        $region37: #{tpu_custom_call.1} parent=31 // pred_check
          %p889 = pneg %p101
        $region38: #{tpu_custom_call.1} parent=31 // pred_check_branch
          %891 = sbr.rel (%p889) target = $region40
        $region39: #{tpu_custom_call.1} parent=31 // pred_region
          %s892 = smul.u32 2, %s15
        $region40: #{tpu_custom_call.1} parent=31 // pred_fallthru
          _
      $region32: #{tpu_custom_call.1} parent=5 // pred_fallthru
        _
      %p893 = scmp.le.s32.totalorder 2, %s10
      // Predicated region
      $region41: #{tpu_custom_call.1} parent=5 // pred_check
        %p894 = pneg %p893
      $region42: #{tpu_custom_call.1} parent=5 // pred_check_branch
        %896 = sbr.rel (%p894) target = $region44
      $region43: #{tpu_custom_call.1} parent=5 // pred_region
        %s897 = ssub.s32 %s10, 2
        // Predicated region
        $region45: #{tpu_custom_call.1} parent=43 // pred_check
          %p898 = pneg %p107
        $region46: #{tpu_custom_call.1} parent=43 // pred_check_branch
          %900 = sbr.rel (%p898) target = $region48
        $region47: #{tpu_custom_call.1} parent=43 // pred_region
          %s901 = smul.u32 2, %s16
          %p902 = scmp.lt.s32.totalorder %s901, 3
          %s903 = scalar_select %p902, %s901, 3
          %s904 = smul.addr %s903, 8
          %s905 = scalar_lea.vmem %s3, %s904
        $region48: #{tpu_custom_call.1} parent=43 // pred_fallthru
          _
      $region44: #{tpu_custom_call.1} parent=5 // pred_fallthru
        _
    $region6: #{tpu_custom_call.1} parent=1 // loop_footer
      %s14 = sadd.s32 1, %s10
    $region7: #{tpu_custom_call.1} parent=1 // loop_footer_branch
      %9 = sbr.rel target = $region3
    $region8: #{tpu_custom_call.1} parent=1 // loop_exit
      _
    %906 = vsyncpa [#allocation3], 1
    %s907 = scalar_lea.sflag [#allocation3], 1
    %908 = vsyncpa %s907, 1

</llo_original>
